<compile_context>
chip_gen: v6e
topology: v6e:2x2x1
jax: 0.10.0
libtpu: 0.0.40
codegen_flags: <defaults>
</compile_context>

<pallas_src>
import functools
import math

import jax
import jax.numpy as jnp
from jax.experimental import pallas as pl
from jax.experimental.pallas import tpu as pltpu

_MIB = 1024 * 1024


def _eca_kernel(x_ref, w_ref, o_ref, acc_ref, *, k, hw_total, hw_tile, needs_mask):
    """x_ref: (BN, C, HW_TILE) VMEM | w_ref: (k,) SMEM
    o_ref: (BN, C, 1) VMEM | acc_ref: (BN, C, 1) f32 VMEM scratch."""
    h = pl.program_id(1)
    last = pl.num_programs(1) - 1

    # Reset the per-batch-block accumulator at the first spatial tile.
    @pl.when(h == 0)
    def _init():
        acc_ref[...] = jnp.zeros_like(acc_ref)

    def _accumulate(masked):
        x = x_ref[...].astype(jnp.float32)  # (BN, C, HW_TILE)
        if masked:
            # Mask lanes past the true spatial extent (ragged last tile only).
            lane = jax.lax.broadcasted_iota(jnp.int32, x.shape, 2)
            x = jnp.where(h * hw_tile + lane < hw_total, x, 0.0)
        # Raw partial sums (exact; divided by HW once at finalize).
        acc_ref[...] += jnp.sum(x, axis=-1, keepdims=True)

    if needs_mask:
        # Keep the steady-state loop minimal: unmasked path for all full
        # tiles, masked path only for the ragged final tile.
        @pl.when(h < last)
        def _acc_full():
            _accumulate(masked=False)

        @pl.when(h == last)
        def _acc_ragged():
            _accumulate(masked=True)
    else:
        _accumulate(masked=False)

    # Finalize: global-average-pool scale, k-tap channel conv, sigmoid.
    @pl.when(h == last)
    def _finalize():
        bn_, c_ = acc_ref.shape[0], acc_ref.shape[1]
        pad = k // 2
        pooled = acc_ref[...] * (1.0 / hw_total)  # (BN, C, 1)

        # Conv1d(1, 1, k, padding=k//2, bias=False) over the channel axis.
        if pad > 0:
            z = jnp.zeros((bn_, pad, 1), jnp.float32)
            padded = jnp.concatenate([z, pooled, z], axis=1)  # (BN, C+2p, 1)
        else:
            padded = pooled

        conv = w_ref[0] * padded[:, 0:c_, :]
        for j in range(1, k):  # k is a small static int -> unrolled
            conv = conv + w_ref[j] * padded[:, j:j + c_, :]

        o_ref[...] = jax.nn.sigmoid(conv).astype(o_ref.dtype)


def _pick_tiling(n, c, hw, itemsize, budget_bytes):
    """Choose (BN, HW_TILE) so one input block fills ~budget_bytes."""
    bytes_per_sample = c * hw * itemsize
    if bytes_per_sample <= budget_bytes:
        # Whole spatial extent in one block; pack BN samples per step
        # (BN must divide N so blocks never run past the array).
        hw_tile = hw
        bn = max(1, min(n, budget_bytes // max(1, bytes_per_sample)))
        while n % bn:
            bn -= 1
    else:
        # Tile the spatial axis (128-lane multiples); one sample per block.
        lanes = (budget_bytes // max(1, c * itemsize)) // 128 * 128
        hw_tile = int(max(128, lanes))
        if hw_tile >= hw:
            hw_tile = hw  # tiny HW but huge C: single full-extent block
        bn = 1
    return int(bn), int(hw_tile)


def eca_forward(x, conv_weight, *, block_budget_bytes=8 * _MIB, bn=None, hw_tile=None):
    """x: (N, C, H, W), conv_weight: (1, 1, k) -> gate of shape (N, C, 1, 1)."""
    N, C, H, W = x.shape
    k = int(conv_weight.shape[-1])
    HW = H * W
    itemsize = jnp.dtype(x.dtype).itemsize

    x3 = x.reshape(N, C, HW)                       # pure view of NCHW
    w = conv_weight.reshape(k).astype(jnp.float32)

    auto_bn, auto_hw_tile = _pick_tiling(N, C, HW, itemsize, block_budget_bytes)
    if hw_tile is None:
        hw_tile = auto_hw_tile
    hw_tile = int(min(hw_tile, HW))
    if bn is None:
        bn = 1 if hw_tile < HW else auto_bn
    bn = int(max(1, min(bn, N)))

    if hw_tile < HW and hw_tile % 128 != 0:
        raise ValueError("hw_tile must be a multiple of 128 when it tiles HW")
    if N % bn != 0:
        raise ValueError("bn must divide N")

    num_hw = pl.cdiv(HW, hw_tile)
    num_n = N // bn
    needs_mask = (hw_tile < HW) and (HW % hw_tile != 0)

    block_bytes = bn * C * hw_tile * itemsize
    total_steps = num_n * num_hw
    # Deeper input buffering only when there are enough steps to exploit it
    # and three buffers stay well inside the scoped-VMEM budget.
    buffers = 3 if (total_steps >= 3 and 3 * block_bytes <= 36 * _MIB) else 2

    vmem_need = (buffers * block_bytes
                 + 2 * bn * C * max(itemsize, 4)   # output block (double-buffered)
                 + bn * C * 4                      # f32 accumulator scratch
                 + 1 * _MIB)                       # slack
    vmem_limit_bytes = int(max(24 * _MIB, vmem_need))

    cost = pl.CostEstimate(
        flops=int(N * C * HW + 2 * N * C * k),
        transcendentals=int(N * C),
        bytes_accessed=int(N * C * HW * itemsize + N * C * itemsize + k * 4),
    )

    x_spec_kwargs = {"pipeline_mode": pl.Buffered(buffers)} if buffers != 2 else {}

    kernel = functools.partial(
        _eca_kernel, k=k, hw_total=HW, hw_tile=hw_tile, needs_mask=needs_mask
    )

    out = pl.pallas_call(
        kernel,
        out_shape=jax.ShapeDtypeStruct((N, C, 1), x.dtype),
        grid=(num_n, num_hw),
        in_specs=[
            # Lane-dense input tile: C on sublanes, HW_TILE on lanes, BN packed.
            pl.BlockSpec((bn, C, hw_tile), lambda n, h: (n, 0, h), **x_spec_kwargs),
            # Tiny conv weight lives in SMEM (scalar reads in the tap loop).
            pl.BlockSpec(memory_space=pltpu.MemorySpace.SMEM),
        ],
        # Same output block for every spatial step -> stays resident across
        # the reduction axis; written back once per batch block.
        out_specs=pl.BlockSpec((bn, C, 1), lambda n, h: (n, 0, 0)),
        scratch_shapes=[pltpu.VMEM((bn, C, 1), jnp.float32)],
        compiler_params=pltpu.CompilerParams(
            dimension_semantics=("parallel", "arbitrary"),
            vmem_limit_bytes=vmem_limit_bytes,
        ),
        cost_estimate=cost,
    )(x3, w)

    return out.reshape(N, C, 1, 1)


def eca_reference(x, conv_weight):
    """Pure-JAX reference mirroring the PyTorch module."""
    N, C, H, W = x.shape
    k = conv_weight.shape[-1]
    pad = k // 2
    pooled = jnp.mean(x, axis=(2, 3))                   # (N, C)
    padded = jnp.pad(pooled, ((0, 0), (pad, pad)))      # (N, C + 2*pad)
    out = jnp.zeros_like(pooled)
    for j in range(k):
        out = out + conv_weight[0, 0, j] * padded[:, j:j + C]
    return jax.nn.sigmoid(out).reshape(N, C, 1, 1)


def _eca_kernel_size(c, b=1, gamma=2):
    t = int(abs((math.log(c, 2) + b) / gamma))
    return t if t % 2 else t + 1


def _check(name, out, ref):
    assert out.shape == ref.shape, f"{name}: shape {out.shape} vs {ref.shape}"
    assert jnp.allclose(out, ref, rtol=1e-5, atol=1e-6), f"{name}: mismatch vs reference"


if __name__ == "__main__":
    key = jax.random.PRNGKey(0)
    keys = jax.random.split(key, 6)

    # ---- Case 1: small feature map -> batch-packed single-step path (grid (1,1)).
    N, C, H, W = 2, 16, 16, 16
    k = _eca_kernel_size(C)                      # k = 3 for C = 16
    bound = 1.0 / math.sqrt(1 * k)               # PyTorch Conv1d default init bound
    x = jax.random.normal(keys[0], (N, C, H, W), dtype=jnp.float32)
    w = jax.random.uniform(keys[1], (1, 1, k), minval=-bound, maxval=bound,
                           dtype=jnp.float32)
    out = jax.block_until_ready(eca_forward(x, w))
    _check("case1", out, eca_reference(x, w))

    # ---- Case 2: forced spatial tiling with a ragged last tile; exercises the
    #      accumulator, last-step-only masking and the Buffered(3) input path.
    N, C, H, W = 2, 16, 18, 18                   # HW = 324 = 2*128 + 68
    k = _eca_kernel_size(C)
    x = jax.random.normal(keys[2], (N, C, H, W), dtype=jnp.float32)
    w = jax.random.uniform(keys[3], (1, 1, k), minval=-bound, maxval=bound,
                           dtype=jnp.float32)
    out = jax.block_until_ready(eca_forward(x, w, hw_tile=128, bn=1))
    _check("case2", out, eca_reference(x, w))

    # ---- Case 3: default tiling on the same non-128-multiple HW -> single
    #      full-extent block (the previously-untested path from the review).
    out = jax.block_until_ready(eca_forward(x, w))
    _check("case3", out, eca_reference(x, w))

    # ---- Case 4: batch-packed (BN=2) AND spatially tiled with a ragged last tile.
    N, C, H, W = 4, 8, 20, 20                    # HW = 400 = 3*128 + 16
    k = _eca_kernel_size(C)                      # k = 3 for C = 8
    bound = 1.0 / math.sqrt(1 * k)
    x = jax.random.normal(keys[4], (N, C, H, W), dtype=jnp.float32)
    w = jax.random.uniform(keys[5], (1, 1, k), minval=-bound, maxval=bound,
                           dtype=jnp.float32)
    out = jax.block_until_ready(eca_forward(x, w, hw_tile=128, bn=2))
    _check("case4", out, eca_reference(x, w))

    print("KERNEL_OK")
</pallas_src>

<mosaic_0001>
module attributes {stable_mosaic.version = 11 : i64} {
  func.func @_eca_kernel(%arg0: i32, %arg1: i32, %arg2: memref<2x16x256xf32, #tpu.memory_space<vmem>>, %arg3: memref<3xf32, #tpu.memory_space<smem>>, %arg4: memref<2x16x1xf32, #tpu.memory_space<vmem>>, %arg5: memref<2x16x1xf32, #tpu.memory_space<vmem>>) attributes {dimension_semantics = [#tpu.dimension_semantics<parallel>, #tpu.dimension_semantics<arbitrary>], iteration_bounds = array<i64: 1, 1>, scalar_prefetch = 0 : i64, scratch_operands = 1 : i64, tpu.core_type = #tpu.core_type<tc>, window_params = [{transform_indices = @transform_0, window_bounds = array<i64: 2, 16, 256>}, {transform_indices = @transform_1, window_bounds = array<i64: 3>}, {transform_indices = @transform_2, window_bounds = array<i64: 2, 16, 1>}]} {
    %c0_i32 = arith.constant 0 : i32
    %0 = arith.cmpi eq, %arg1, %c0_i32 : i32
    %1 = arith.extui %0 : i1 to i32
    %c0_i32_0 = arith.constant 0 : i32
    %2 = arith.cmpi ne, %1, %c0_i32_0 : i32
    scf.if %2 {
      %cst_11 = arith.constant 0.000000e+00 : f32
      %12 = vector.broadcast %cst_11 : f32 to vector<2x16x1xf32>
      %c0_12 = arith.constant 0 : index
      %c0_13 = arith.constant 0 : index
      %c0_14 = arith.constant 0 : index
      %13 = vector.load %arg5[%c0_12, %c0_13, %c0_14] : memref<2x16x1xf32, #tpu.memory_space<vmem>>, vector<2x16x1xf32>
      tpu.vector_store %arg5[%c0_12, %c0_13, %c0_14], %12 {strides = array<i32>} : memref<2x16x1xf32, #tpu.memory_space<vmem>>, vector<2x16x1xf32>,
    } else {
    }
    %c0 = arith.constant 0 : index
    %c0_1 = arith.constant 0 : index
    %c0_2 = arith.constant 0 : index
    %3 = vector.load %arg2[%c0, %c0_1, %c0_2] : memref<2x16x256xf32, #tpu.memory_space<vmem>>, vector<2x16x256xf32>
    %c0_3 = arith.constant 0 : index
    %c0_4 = arith.constant 0 : index
    %c0_5 = arith.constant 0 : index
    %4 = vector.load %arg5[%c0_3, %c0_4, %c0_5] : memref<2x16x1xf32, #tpu.memory_space<vmem>>, vector<2x16x1xf32>
    %cst = arith.constant dense<0.000000e+00> : vector<2x16xf32>
    %5 = vector.multi_reduction <add>, %3, %cst [2] : vector<2x16x256xf32> to vector<2x16xf32>
    %6 = vector.shape_cast %5 : vector<2x16xf32> to vector<2x16x1xf32>
    %7 = arith.addf %4, %6 : vector<2x16x1xf32>
    %c0_6 = arith.constant 0 : index
    %c0_7 = arith.constant 0 : index
    %c0_8 = arith.constant 0 : index
    %8 = vector.load %arg5[%c0_6, %c0_7, %c0_8] : memref<2x16x1xf32, #tpu.memory_space<vmem>>, vector<2x16x1xf32>
    tpu.vector_store %arg5[%c0_6, %c0_7, %c0_8], %7 {strides = array<i32>} : memref<2x16x1xf32, #tpu.memory_space<vmem>>, vector<2x16x1xf32>,
    %c0_i32_9 = arith.constant 0 : i32
    %9 = arith.cmpi eq, %arg1, %c0_i32_9 : i32
    %10 = arith.extui %9 : i1 to i32
    %c0_i32_10 = arith.constant 0 : i32
    %11 = arith.cmpi ne, %10, %c0_i32_10 : i32
    scf.if %11 {
      %c0_11 = arith.constant 0 : index
      %c0_12 = arith.constant 0 : index
      %c0_13 = arith.constant 0 : index
      %12 = vector.load %arg5[%c0_11, %c0_12, %c0_13] : memref<2x16x1xf32, #tpu.memory_space<vmem>>, vector<2x16x1xf32>
      %cst_14 = arith.constant 3.906250e-03 : f32
      %13 = vector.broadcast %cst_14 : f32 to vector<2x16x1xf32>
      %14 = arith.mulf %12, %13 : vector<2x16x1xf32>
      %cst_15 = arith.constant 0.000000e+00 : f32
      %15 = vector.broadcast %cst_15 : f32 to vector<2x1x1xf32>
      %16 = tpu.concatenate %15, %14, %15 in 1 : vector<2x1x1xf32>, vector<2x16x1xf32>, vector<2x1x1xf32> -> vector<2x18x1xf32>
      %c0_16 = arith.constant 0 : index
      %17 = memref.load %arg3[%c0_16] : memref<3xf32, #tpu.memory_space<smem>>
      %18 = vector.extract_strided_slice %16 {offsets = [0, 0, 0], sizes = [2, 16, 1], strides = [1, 1, 1]} : vector<2x18x1xf32> to vector<2x16x1xf32>
      %19 = vector.broadcast %17 : f32 to vector<2x16x1xf32>
      %20 = arith.mulf %19, %18 : vector<2x16x1xf32>
      %c1 = arith.constant 1 : index
      %21 = memref.load %arg3[%c1] : memref<3xf32, #tpu.memory_space<smem>>
      %22 = vector.extract_strided_slice %16 {offsets = [0, 1, 0], sizes = [2, 16, 1], strides = [1, 1, 1]} : vector<2x18x1xf32> to vector<2x16x1xf32>
      %23 = vector.broadcast %21 : f32 to vector<2x16x1xf32>
      %24 = arith.mulf %23, %22 : vector<2x16x1xf32>
      %25 = arith.addf %20, %24 : vector<2x16x1xf32>
      %c2 = arith.constant 2 : index
      %26 = memref.load %arg3[%c2] : memref<3xf32, #tpu.memory_space<smem>>
      %27 = vector.extract_strided_slice %16 {offsets = [0, 2, 0], sizes = [2, 16, 1], strides = [1, 1, 1]} : vector<2x18x1xf32> to vector<2x16x1xf32>
      %28 = vector.broadcast %26 : f32 to vector<2x16x1xf32>
      %29 = arith.mulf %28, %27 : vector<2x16x1xf32>
      %30 = arith.addf %25, %29 : vector<2x16x1xf32>
      %31 = arith.negf %30 : vector<2x16x1xf32>
      %32 = math.exp %31 : vector<2x16x1xf32>
      %cst_17 = arith.constant 1.000000e+00 : f32
      %33 = vector.broadcast %cst_17 : f32 to vector<2x16x1xf32>
      %34 = arith.addf %33, %32 : vector<2x16x1xf32>
      %35 = arith.divf %33, %34 : vector<2x16x1xf32>
      %c0_18 = arith.constant 0 : index
      %c0_19 = arith.constant 0 : index
      %c0_20 = arith.constant 0 : index
      %36 = vector.load %arg4[%c0_18, %c0_19, %c0_20] : memref<2x16x1xf32, #tpu.memory_space<vmem>>, vector<2x16x1xf32>
      tpu.vector_store %arg4[%c0_18, %c0_19, %c0_20], %35 {strides = array<i32>} : memref<2x16x1xf32, #tpu.memory_space<vmem>>, vector<2x16x1xf32>,
    } else {
    }
    return
  }
  func.func @transform_0(%arg0: i32, %arg1: i32) -> (i32, i32, i32) {
    %c0_i32 = arith.constant 0 : i32
    %c0_i32_0 = arith.constant 0 : i32
    return %arg0, %c0_i32, %arg1 : i32, i32, i32
  }
  func.func @transform_1(%arg0: i32, %arg1: i32) -> i32 {
    %c0_i32 = arith.constant 0 : i32
    %c0_i32_0 = arith.constant 0 : i32
    return %c0_i32 : i32
  }
  func.func @transform_2(%arg0: i32, %arg1: i32) -> (i32, i32, i32) {
    %c0_i32 = arith.constant 0 : i32
    %c0_i32_0 = arith.constant 0 : i32
    %c0_i32_1 = arith.constant 0 : i32
    return %arg0, %c0_i32, %c0_i32_0 : i32, i32, i32
  }
}

</mosaic_0001>

<llo_original>
// kernel: tpu_custom_call.1
$region0: #{tpu_custom_call.1}
  #allocation0 [shape = 'u32[]', space=smem, size = 0x4, offset = 0x4, fixed_abs, tag = 'smem constant byte address 0x4 - core index']
  #allocation1 [shape = 'u32[144,128]{1,0:T(1,128)}', space=vmem, size = 0x12000, scoped, tag = 'internal scratch']
  #allocation2 [shape = 'f32[2,16,1]{2,1,0:T(8,128)}', space=vmem, size = 0x4000, scoped, tag = 'scratch operand']
  %s0 = inlined_call_operand.hbm [shape: f32[2,16,256], index: 0, kind: input, shape index: {}]
  %s1 = inlined_call_operand.vmem [shape: f32[3], index: 1, kind: input, shape index: {}]
  %s2 = inlined_call_operand.vmem [shape: f32[2,16,1], index: 2, kind: output, shape index: {}]
  %s3 = sld [smem:[#allocation0]]
  $region34: #{tpu_custom_call.1} parent=0
    _
  %s5 = ssub.s32 1, %s3
  %s6 = scalar_select 0, %s5, %s3
  $region1: #{tpu_custom_call.1} parent=0
    #allocation3 [shape = 'u8[32768]{0}', space=vmem, size = 0x8000, scoped, tag = 'input window, operand 0, single buffered']
    #allocation4 [shape = 's32[1]{0}', space=sflag, size = 0x4, scoped, tag = 'scoped memory for tpu_custom_call.1']
    #allocation5 [shape = 's32[1]{0}', space=sflag, size = 0x4, scoped, tag = 'scoped memory for tpu_custom_call.1']
    #allocation6 [shape = 'u8[512]{0}', space=smem, size = 0x200, scoped, tag = 'input window, operand 1, single buffered']
    %7 = vsyncpa [#allocation4], 0
    %8 = vsyncpa [#allocation5], 0
    // Predicated region
    $region2: #{tpu_custom_call.1} parent=1 // pred_check
      _
    $region3: #{tpu_custom_call.1} parent=1 // pred_check_branch
      %10 = sbr.rel (0) target = $region5
    $region4: #{tpu_custom_call.1} parent=1 // pred_region
      %s12 = ssub.s32 1024, 1024
      %13 = vsyncadd [#allocation4], %s12
      %s14 = sshll.u32 [#allocation3], 4
      %s15 = int_to_ptr.vmem [resolvable:$true] %s14
      %20 = dma.hbm_to_vmem [thread:$0]  %s0, 1024, %s15, [#allocation4], 256, 256, 16
    $region5: #{tpu_custom_call.1} parent=1 // pred_fallthru
      _
    // Predicated region
    $region6: #{tpu_custom_call.1} parent=1 // pred_check
      _
    $region7: #{tpu_custom_call.1} parent=1 // pred_check_branch
      %22 = sbr.rel (0) target = $region9
    $region8: #{tpu_custom_call.1} parent=1 // pred_region
      %s24 = ssub.s32 16, 16
      %25 = vsyncadd [#allocation5], %s24
      %s27 = sshll.u32 %s1, 4
      %s28 = int_to_ptr.vmem [resolvable:$true] %s27
      %30 = dma.vmem_to_smem %s28, 16, [#allocation6], [#allocation5]
    $region9: #{tpu_custom_call.1} parent=1 // pred_fallthru
      _
    // Predicated region
    $region10: #{tpu_custom_call.1} parent=1 // pred_check
      _
    $region11: #{tpu_custom_call.1} parent=1 // pred_check_branch
      %32 = sbr.rel (0) target = $region13
    $region12: #{tpu_custom_call.1} parent=1 // pred_region
      %33 = dma.done [#allocation4], 1024
    $region13: #{tpu_custom_call.1} parent=1 // pred_fallthru
      _
    // Predicated region
    $region14: #{tpu_custom_call.1} parent=1 // pred_check
      _
    $region15: #{tpu_custom_call.1} parent=1 // pred_check_branch
      %35 = sbr.rel (0) target = $region17
    $region16: #{tpu_custom_call.1} parent=1 // pred_region
      %36 = dma.done [#allocation5], 16
    $region17: #{tpu_custom_call.1} parent=1 // pred_fallthru
      _
    %37 = sfence
    %p38 = scmp.eq.s32.totalorder 0, 0
    // Predicated region
    $region18: #{tpu_custom_call.1} parent=1 // pred_check
      %p39 = pneg %p38
    $region19: #{tpu_custom_call.1} parent=1 // pred_check_branch
      %41 = sbr.rel (%p39) target = $region21
    $region20: #{tpu_custom_call.1} parent=1 // pred_region
      %vm42 = vcmask 7168
      %43 = vst.msk [vmem:[#allocation2] sm:$0xff] %vm42, 0.0
      %44 = vst.msk [vmem:[#allocation2 + $0x8] sm:$0xff] %vm42, 0.0
      %45 = vst.msk [vmem:[#allocation2 + $0x10] sm:$0xff] %vm42, 0.0
      %46 = vst.msk [vmem:[#allocation2 + $0x18] sm:$0xff] %vm42, 0.0
    $region21: #{tpu_custom_call.1} parent=1 // pred_fallthru
      _
    %v47 = vld [vmem:[#allocation3] sm:$0xff]
    %v48 = vld [vmem:[#allocation3 + $0x8] sm:$0xff]
    %v49 = vld [vmem:[#allocation3 + $0x10] sm:$0xff]
    %v50 = vld [vmem:[#allocation3 + $0x18] sm:$0xff]
    %v51 = vld [vmem:[#allocation3 + $0x20] sm:$0xff]
    %v52 = vld [vmem:[#allocation3 + $0x28] sm:$0xff]
    %v53 = vld [vmem:[#allocation3 + $0x30] sm:$0xff]
    %v54 = vld [vmem:[#allocation3 + $0x38] sm:$0xff]
    %v55 = vld [vmem:[#allocation2] sm:$0xff]
    %v56 = vld [vmem:[#allocation2 + $0x8] sm:$0xff]
    %v57 = vld [vmem:[#allocation2 + $0x10] sm:$0xff]
    %v58 = vld [vmem:[#allocation2 + $0x18] sm:$0xff]
    %v59 = vadd.f32 %v47, %v48
    %60 = vadd.xlane.f32.xlu0 %v59
    %v61 = vpop.xlane.xlu0 %60
    %v62 = vadd.f32 %v49, %v50
    %63 = vadd.xlane.f32.xlu0 %v62
    %v64 = vpop.xlane.xlu0 %63
    %v65 = vadd.f32 %v51, %v52
    %66 = vadd.xlane.f32.xlu0 %v65
    %v67 = vpop.xlane.xlu0 %66
    %v68 = vadd.f32 %v53, %v54
    %69 = vadd.xlane.f32.xlu0 %v68
    %v70 = vpop.xlane.xlu0 %69
    %v71 = vadd.f32 %v55, %v61
    %v72 = vadd.f32 %v56, %v64
    %v73 = vadd.f32 %v57, %v67
    %v74 = vadd.f32 %v58, %v70
    %vm75 = vcmask 7168
    %76 = vst.msk [vmem:[#allocation2] sm:$0xff] %vm75, %v71
    %77 = vst.msk [vmem:[#allocation2 + $0x8] sm:$0xff] %vm75, %v72
    %78 = vst.msk [vmem:[#allocation2 + $0x10] sm:$0xff] %vm75, %v73
    %79 = vst.msk [vmem:[#allocation2 + $0x18] sm:$0xff] %vm75, %v74
    // Predicated region
    $region22: #{tpu_custom_call.1} parent=1 // pred_check
      %p80 = pneg %p38
    $region23: #{tpu_custom_call.1} parent=1 // pred_check_branch
      %82 = sbr.rel (%p80) target = $region25
    $region24: #{tpu_custom_call.1} parent=1 // pred_region
      %v83 = vld [vmem:[#allocation2] sm:$0xff]
      %v84 = vld [vmem:[#allocation2 + $0x8] sm:$0xff]
      %v85 = vld [vmem:[#allocation2 + $0x10] sm:$0xff]
      %v86 = vld [vmem:[#allocation2 + $0x18] sm:$0xff]
      %v87 = vmul.f32 %v83, 0.00390625
      %v88 = vmul.f32 %v84, 0.00390625
      %v89 = vmul.f32 %v85, 0.00390625
      %v90 = vmul.f32 %v86, 0.00390625
      %vm95 = vcmask 1040384
      %v96 = vrot.slane %v87, 7
      %v97 = vrot.slane %v88, 7
      %v98 = vsel %vm95, %v96, %v97
      %v99 = vrot.slane %v89, 7
      %v100 = vrot.slane %v90, 7
      %v101 = vsel %vm95, %v99, %v100
      %v108 = vsel %vm95, 0.0, %v96
      %v109 = vsel %vm95, 0.0, %v99
      %v110 = vsel %vm95, %v97, 0.0
      %v111 = vsel %vm95, %v100, 0.0
      %s112 = sld [smem:[#allocation6]]
      %v113 = vstv %s112
      %v114 = vmul.f32 %v113, %v108
      %v115 = vmul.f32 %v113, %v98
      %v116 = vmul.f32 %v113, %v109
      %v117 = vmul.f32 %v113, %v101
      %s118 = sld [smem:[#allocation6 + $0x1]]
      %v119 = vstv %s118
      %v120 = vmul.f32 %v119, %v108
      %v121 = vmul.f32 %v119, %v98
      %v122 = vmul.f32 %v119, %v110
      %v123 = vmul.f32 %v119, %v109
      %v124 = vmul.f32 %v119, %v101
      %v125 = vmul.f32 %v119, %v111
      %vm132 = vcmask 1046528
      %v133 = vrot.slane %v120, 1
      %v134 = vrot.slane %v121, 1
      %v135 = vsel %vm132, %v133, %v134
      %v136 = vrot.slane %v122, 1
      %v137 = vsel %vm132, %v134, %v136
      %v138 = vrot.slane %v123, 1
      %v139 = vrot.slane %v124, 1
      %v140 = vsel %vm132, %v138, %v139
      %v141 = vrot.slane %v125, 1
      %v142 = vsel %vm132, %v139, %v141
      %v147 = vadd.f32 %v114, %v135
      %v148 = vadd.f32 %v115, %v137
      %v149 = vadd.f32 %v116, %v140
      %v150 = vadd.f32 %v117, %v142
      %s151 = sld [smem:[#allocation6 + $0x2]]
      %v152 = vstv %s151
      %v153 = vmul.f32 %v152, %v108
      %v154 = vmul.f32 %v152, %v98
      %v155 = vmul.f32 %v152, %v110
      %v156 = vmul.f32 %v152, %v109
      %v157 = vmul.f32 %v152, %v101
      %v158 = vmul.f32 %v152, %v111
      %vm165 = vcmask 1045504
      %v166 = vrot.slane %v153, 2
      %v167 = vrot.slane %v154, 2
      %v168 = vsel %vm165, %v166, %v167
      %v169 = vrot.slane %v155, 2
      %v170 = vsel %vm165, %v167, %v169
      %v171 = vrot.slane %v156, 2
      %v172 = vrot.slane %v157, 2
      %v173 = vsel %vm165, %v171, %v172
      %v174 = vrot.slane %v158, 2
      %v175 = vsel %vm165, %v172, %v174
      %v180 = vadd.f32 %v147, %v168
      %v181 = vadd.f32 %v148, %v170
      %v182 = vadd.f32 %v149, %v173
      %v183 = vadd.f32 %v150, %v175
      %v184 = vxor.u32 %v180, 2147483648
      %v185 = vxor.u32 %v181, 2147483648
      %v186 = vxor.u32 %v182, 2147483648
      %v187 = vxor.u32 %v183, 2147483648
      %v188 = vmul.f32 %v184, 1.442695
      %v189 = vpow.pop %v188
      %v190 = vmul.f32 %v185, 1.442695
      %v191 = vpow.pop %v190
      %v192 = vmul.f32 %v186, 1.442695
      %v193 = vpow.pop %v192
      %v194 = vmul.f32 %v187, 1.442695
      %v195 = vpow.pop %v194
      %v196 = vadd.f32 %v189, 1.0
      %v197 = vadd.f32 %v191, 1.0
      %v198 = vadd.f32 %v193, 1.0
      %v199 = vadd.f32 %v195, 1.0
      %v200 = vrcp.pop %v196
      %v201 = vmul.f32 1.0, %v200
      %v202 = vrcp.pop %v197
      %v203 = vmul.f32 1.0, %v202
      %v204 = vrcp.pop %v198
      %v205 = vmul.f32 1.0, %v204
      %v206 = vrcp.pop %v199
      %v207 = vmul.f32 1.0, %v206
      %208 = vst.msk [vmem:[%s2] sm:$0xff] %vm75, %v201
      %209 = vst.msk [vmem:[%s2 + $0x8] sm:$0xff] %vm75, %v203
      %210 = vst.msk [vmem:[%s2 + $0x10] sm:$0xff] %vm75, %v205
      %211 = vst.msk [vmem:[%s2 + $0x18] sm:$0xff] %vm75, %v207
    $region25: #{tpu_custom_call.1} parent=1 // pred_fallthru
      _
    // Predicated region
    $region26: #{tpu_custom_call.1} parent=1 // pred_check
      _
    $region27: #{tpu_custom_call.1} parent=1 // pred_check_branch
      %213 = sbr.rel (0) target = $region29
    $region28: #{tpu_custom_call.1} parent=1 // pred_region
      _
    $region29: #{tpu_custom_call.1} parent=1 // pred_fallthru
      _
    // Predicated region
    $region30: #{tpu_custom_call.1} parent=1 // pred_check
      _
    $region31: #{tpu_custom_call.1} parent=1 // pred_check_branch
      %215 = sbr.rel (0) target = $region33
    $region32: #{tpu_custom_call.1} parent=1 // pred_region
      _
    $region33: #{tpu_custom_call.1} parent=1 // pred_fallthru
      _
    %216 = vsyncpa [#allocation4], 1
    %217 = vsyncpa [#allocation5], 1

</llo_original>
